<compile_context>
chip_gen: v5e
topology: v5e:2x2
jax: 0.10.0
libtpu: 0.0.40
codegen_flags: <defaults>
</compile_context>

<pallas_src>
import collections
import functools

import jax
import jax.numpy as jnp
from jax.experimental import pallas as pl
from jax.experimental.pallas import tpu as pltpu

EPS = 1e-5
LANES = 128
SUBLANES = 8

Config = collections.namedtuple("Config", ["use_bn", "fold", "dims"])
Prepared = collections.namedtuple("Prepared", ["operands", "config"])


def _slab_layout(use_bn, fold, feat, num_classes):
    """Ordered keys of the lane-padded vector slab (shared by packer & kernel)."""
    keys = []
    if fold:
        keys += [("w1", k) for k in range(feat)]           # rows of w1 (len d1)
        keys += [("w4t", c) for c in range(num_classes)]   # columns of w4 (len d3)
    if use_bn:
        # fc1/fc2/fc3 biases are dead under batch-stat BN -> not packed.
        keys += [("g1", None), ("be1", None), ("g2", None), ("be2", None),
                 ("g3", None), ("be3", None), ("b4", None)]
    else:
        keys += [("b1", None), ("b2", None), ("b3", None), ("b4", None)]
    return keys


def _mlp_kernel(*refs, use_bn, fold, dims):
    feat, d1, d2, d3, nc = dims
    x_ref = refs[0]
    if fold:
        w2_ref, w3_ref, vec_ref = refs[1:4]
        w1_ref = w4_ref = None
    else:
        w1_ref, w2_ref, w3_ref, w4_ref, vec_ref = refs[1:6]
    o_ref = refs[-1]

    batch = x_ref.shape[0]
    inv_b = 1.0 / batch

    row_of = {k: i for i, k in enumerate(_slab_layout(use_bn, fold, feat, nc))}

    def vrow(key, length):
        # Direct (1, length) read from the slab ref (static slice, no full-slab load).
        r = row_of[key]
        return vec_ref[r:r + 1, :length]

    def matmul(h, w_ref):
        # Weights may be stored bf16; accumulate / compute in f32.
        return jnp.dot(h, w_ref[...].astype(jnp.float32),
                       preferred_element_type=jnp.float32)

    def bn_relu(h, li, dout):
        # BatchNorm1d (training mode): single-pass batch statistics via two
        # independent reductions; affine folded into one scale/shift.
        g = vrow(("g%d" % li, None), dout)
        be = vrow(("be%d" % li, None), dout)
        s1 = jnp.sum(h, axis=0, keepdims=True)
        s2 = jnp.sum(h * h, axis=0, keepdims=True)
        mu = s1 * inv_b
        var = jnp.maximum(s2 * inv_b - mu * mu, 0.0)   # guard cancellation
        scale = g * jax.lax.rsqrt(var + EPS)           # EUP rsqrt
        shift = be - mu * scale
        return jnp.maximum(h * scale + shift, 0.0)

    x = x_ref[...].astype(jnp.float32)

    # ---- layer 1: F broadcast-MACs on the VPU (w1 folded into the slab) ----
    if fold:
        h = x[:, 0:1] * vrow(("w1", 0), d1)
        for k in range(1, feat):
            h = h + x[:, k:k + 1] * vrow(("w1", k), d1)
    else:
        h = matmul(x, w1_ref)
    h = bn_relu(h, 1, d1) if use_bn else jnp.maximum(h + vrow(("b1", None), d1), 0.0)

    # ---- layer 2 (MXU) ----
    h = matmul(h, w2_ref)
    h = bn_relu(h, 2, d2) if use_bn else jnp.maximum(h + vrow(("b2", None), d2), 0.0)

    # ---- layer 3 (MXU) ----
    h = matmul(h, w3_ref)
    h = bn_relu(h, 3, d3) if use_bn else jnp.maximum(h + vrow(("b3", None), d3), 0.0)

    # ---- layer 4: C lane-reductions on the XLU (w4^T folded into the slab) ----
    if fold:
        lane = jax.lax.broadcasted_iota(jnp.int32, (batch, nc), 1)
        out = jnp.zeros((batch, nc), jnp.float32)
        for c in range(nc):
            col = jnp.sum(h * vrow(("w4t", c), d3), axis=-1, keepdims=True)  # (B,1)
            out = out + jnp.where(lane == c, col, 0.0)
    else:
        out = matmul(h, w4_ref)
    out = out + vrow(("b4", None), nc)

    o_ref[...] = out.astype(o_ref.dtype)


def _slab_vector(params, key):
    name, sub = key
    if name == "w1":
        return params["w1"][sub, :]
    if name == "w4t":
        return params["w4"][:, sub]
    return params[name].reshape(-1)


def prepare_params(params, *, use_bn, weight_dtype=jnp.bfloat16):
    """One-time packing: vector slab + (optionally bf16) weight operands."""
    feat, d1 = params["w1"].shape
    d2 = params["w2"].shape[1]
    d3 = params["w3"].shape[1]
    nc = params["w4"].shape[1]
    dims = (feat, d1, d2, d3, nc)

    fold = (feat <= SUBLANES and nc <= SUBLANES
            and d1 <= LANES and d3 <= LANES and nc <= LANES)

    rows = []
    for key in _slab_layout(use_bn, fold, feat, nc):
        v = _slab_vector(params, key).astype(jnp.float32).reshape(-1)
        rows.append(jnp.pad(v, (0, LANES - v.shape[0])))
    slab = jnp.stack(rows, axis=0)
    pad = (-slab.shape[0]) % SUBLANES
    if pad:
        slab = jnp.pad(slab, ((0, pad), (0, 0)))

    w2 = params["w2"].astype(weight_dtype)   # dominant DMA bytes -> bf16
    w3 = params["w3"].astype(weight_dtype)
    if fold:
        operands = (w2, w3, slab)
    else:
        operands = (params["w1"].astype(jnp.float32), w2, w3,
                    params["w4"].astype(jnp.float32), slab)

    return Prepared(operands=operands,
                    config=Config(use_bn=bool(use_bn), fold=bool(fold), dims=dims))


def _forward_impl(x, operands, config):
    batch = x.shape[0]
    num_classes = config.dims[-1]
    kernel = functools.partial(_mlp_kernel, use_bn=config.use_bn,
                               fold=config.fold, dims=config.dims)
    vmem_spec = pl.BlockSpec(memory_space=pltpu.MemorySpace.VMEM)
    return pl.pallas_call(
        kernel,
        out_shape=jax.ShapeDtypeStruct((batch, num_classes), jnp.float32),
        in_specs=[vmem_spec] * (1 + len(operands)),
        out_specs=vmem_spec,
        compiler_params=pltpu.CompilerParams(vmem_limit_bytes=4 * 1024 * 1024),
    )(x, *operands)


_forward = jax.jit(_forward_impl, static_argnames=("config",))


def mlp_forward(x, prepared):
    return _forward(x, prepared.operands, config=prepared.config)


# ----------------------------- reference & test -----------------------------

def _reference(x, params, *, use_bn):
    def dense(h, w, b):
        return h @ w + b

    def bn(h, g, be):
        mu = jnp.mean(h, axis=0, keepdims=True)
        var = jnp.mean((h - mu) ** 2, axis=0, keepdims=True)
        return (h - mu) / jnp.sqrt(var + EPS) * g + be

    h = x.astype(jnp.float32)
    h = dense(h, params["w1"], params["b1"])
    if use_bn:
        h = bn(h, params["g1"], params["be1"])
    h = jnp.maximum(h, 0.0)
    h = dense(h, params["w2"], params["b2"])
    if use_bn:
        h = bn(h, params["g2"], params["be2"])
    h = jnp.maximum(h, 0.0)
    h = dense(h, params["w3"], params["b3"])
    if use_bn:
        h = bn(h, params["g3"], params["be3"])
    h = jnp.maximum(h, 0.0)
    h = dense(h, params["w4"], params["b4"])
    return h


def _roundtrip_params(params, weight_dtype):
    """Reference params matching the kernel's stored weight precision."""
    q = dict(params)
    q["w2"] = params["w2"].astype(weight_dtype).astype(jnp.float32)
    q["w3"] = params["w3"].astype(weight_dtype).astype(jnp.float32)
    return q


def init_params(key, feature_dim=2, num_classes=2):
    dims = [(feature_dim, 50), (50, 100), (100, 50), (50, num_classes)]
    params = {}
    keys = jax.random.split(key, 2 * len(dims))
    for li, (din, dout) in enumerate(dims):
        bound = 1.0 / (din ** 0.5)  # PyTorch Linear default init range
        params[f"w{li+1}"] = jax.random.uniform(
            keys[2 * li], (din, dout), jnp.float32, -bound, bound)
        params[f"b{li+1}"] = jax.random.uniform(
            keys[2 * li + 1], (1, dout), jnp.float32, -bound, bound)
    # BatchNorm affine params (gamma=1, beta=0 at init).
    for li, dout in enumerate([50, 100, 50], start=1):
        params[f"g{li}"] = jnp.ones((1, dout), jnp.float32)
        params[f"be{li}"] = jnp.zeros((1, dout), jnp.float32)
    return params


if __name__ == "__main__":
    key = jax.random.PRNGKey(0)
    k_x, k_p = jax.random.split(key)

    B, feature_dim, num_classes = 8, 2, 2
    x = jax.random.normal(k_x, (B, feature_dim), jnp.float32)
    params = init_params(k_p, feature_dim=feature_dim, num_classes=num_classes)

    ok = True
    for use_bn in (False, True):               # args.batch_norm == 'false' / 'true'
        for wdt in (jnp.float32, jnp.bfloat16):
            prepared = prepare_params(params, use_bn=use_bn, weight_dtype=wdt)
            out = mlp_forward(x, prepared)
            jax.block_until_ready(out)

            # Kernel check against a reference using exactly the weights the
            # kernel sees (tolerance covers the single-pass variance form).
            ref_same = _reference(x, _roundtrip_params(params, wdt), use_bn=use_bn)
            ok &= bool(jnp.allclose(out, ref_same, atol=1e-3, rtol=1e-3))

            # Drift of the bf16-weight fast path vs the full-f32 module.
            ref_f32 = _reference(x, params, use_bn=use_bn)
            ok &= bool(jnp.allclose(out, ref_f32, atol=5e-2, rtol=5e-2))

    print("KERNEL_OK" if ok else "MISMATCH")
</pallas_src>

<mosaic_0001>
module attributes {stable_mosaic.version = 11 : i64} {
  func.func @_mlp_kernel(%arg0: memref<8x2xf32, #tpu.memory_space<vmem>>, %arg1: memref<50x100xf32, #tpu.memory_space<vmem>>, %arg2: memref<100x50xf32, #tpu.memory_space<vmem>>, %arg3: memref<8x128xf32, #tpu.memory_space<vmem>>, %arg4: memref<8x2xf32, #tpu.memory_space<vmem>>) attributes {dimension_semantics = [], scalar_prefetch = 0 : i64, scratch_operands = 0 : i64, tpu.core_type = #tpu.core_type<tc>} {
    %c0 = arith.constant 0 : index
    %c0_0 = arith.constant 0 : index
    %0 = vector.load %arg0[%c0, %c0_0] : memref<8x2xf32, #tpu.memory_space<vmem>>, vector<8x2xf32>
    %1 = vector.extract_strided_slice %0 {offsets = [0, 0], sizes = [8, 1], strides = [1, 1]} : vector<8x2xf32> to vector<8x1xf32>
    %c0_1 = arith.constant 0 : index
    %c0_2 = arith.constant 0 : index
    %2 = vector.load %arg3[%c0_1, %c0_2] : memref<8x128xf32, #tpu.memory_space<vmem>>, vector<1x50xf32>
    %3 = vector.broadcast %1 : vector<8x1xf32> to vector<8x50xf32>
    %4 = vector.broadcast %2 : vector<1x50xf32> to vector<8x50xf32>
    %5 = arith.mulf %3, %4 : vector<8x50xf32>
    %6 = vector.extract_strided_slice %0 {offsets = [0, 1], sizes = [8, 1], strides = [1, 1]} : vector<8x2xf32> to vector<8x1xf32>
    %c1 = arith.constant 1 : index
    %c0_3 = arith.constant 0 : index
    %7 = vector.load %arg3[%c1, %c0_3] : memref<8x128xf32, #tpu.memory_space<vmem>>, vector<1x50xf32>
    %8 = vector.broadcast %6 : vector<8x1xf32> to vector<8x50xf32>
    %9 = vector.broadcast %7 : vector<1x50xf32> to vector<8x50xf32>
    %10 = arith.mulf %8, %9 : vector<8x50xf32>
    %11 = arith.addf %5, %10 : vector<8x50xf32>
    %c4 = arith.constant 4 : index
    %c0_4 = arith.constant 0 : index
    %12 = vector.load %arg3[%c4, %c0_4] : memref<8x128xf32, #tpu.memory_space<vmem>>, vector<1x50xf32>
    %13 = vector.broadcast %12 : vector<1x50xf32> to vector<8x50xf32>
    %14 = arith.addf %11, %13 : vector<8x50xf32>
    %cst = arith.constant 0.000000e+00 : f32
    %15 = vector.broadcast %cst : f32 to vector<8x50xf32>
    %16 = arith.maximumf %14, %15 : vector<8x50xf32>
    %c0_5 = arith.constant 0 : index
    %c0_6 = arith.constant 0 : index
    %17 = vector.load %arg1[%c0_5, %c0_6] : memref<50x100xf32, #tpu.memory_space<vmem>>, vector<50x100xf32>
    %cst_7 = arith.constant dense<0.000000e+00> : vector<8x100xf32>
    %18 = tpu.matmul %16, %17, %cst_7 {dimension_numbers = #tpu.dot_dimension_numbers<[1], [0], [0], [1], [0, 0, 1, 1], [], []>} : vector<8x50xf32>, vector<50x100xf32>, vector<8x100xf32> -> vector<8x100xf32>
    %c5 = arith.constant 5 : index
    %c0_8 = arith.constant 0 : index
    %19 = vector.load %arg3[%c5, %c0_8] : memref<8x128xf32, #tpu.memory_space<vmem>>, vector<1x100xf32>
    %20 = vector.broadcast %19 : vector<1x100xf32> to vector<8x100xf32>
    %21 = arith.addf %18, %20 : vector<8x100xf32>
    %cst_9 = arith.constant 0.000000e+00 : f32
    %22 = vector.broadcast %cst_9 : f32 to vector<8x100xf32>
    %23 = arith.maximumf %21, %22 : vector<8x100xf32>
    %c0_10 = arith.constant 0 : index
    %c0_11 = arith.constant 0 : index
    %24 = vector.load %arg2[%c0_10, %c0_11] : memref<100x50xf32, #tpu.memory_space<vmem>>, vector<100x50xf32>
    %cst_12 = arith.constant dense<0.000000e+00> : vector<8x50xf32>
    %25 = tpu.matmul %23, %24, %cst_12 {dimension_numbers = #tpu.dot_dimension_numbers<[1], [0], [0], [1], [0, 0, 1, 1], [], []>} : vector<8x100xf32>, vector<100x50xf32>, vector<8x50xf32> -> vector<8x50xf32>
    %c6 = arith.constant 6 : index
    %c0_13 = arith.constant 0 : index
    %26 = vector.load %arg3[%c6, %c0_13] : memref<8x128xf32, #tpu.memory_space<vmem>>, vector<1x50xf32>
    %27 = vector.broadcast %26 : vector<1x50xf32> to vector<8x50xf32>
    %28 = arith.addf %25, %27 : vector<8x50xf32>
    %cst_14 = arith.constant 0.000000e+00 : f32
    %29 = vector.broadcast %cst_14 : f32 to vector<8x50xf32>
    %30 = arith.maximumf %28, %29 : vector<8x50xf32>
    %31 = tpu.iota {dimensions = array<i32: 1>} : vector<8x2xi32>
    %cst_15 = arith.constant 0.000000e+00 : f32
    %32 = vector.broadcast %cst_15 : f32 to vector<8x2xf32>
    %c2 = arith.constant 2 : index
    %c0_16 = arith.constant 0 : index
    %33 = vector.load %arg3[%c2, %c0_16] : memref<8x128xf32, #tpu.memory_space<vmem>>, vector<1x50xf32>
    %34 = vector.broadcast %33 : vector<1x50xf32> to vector<8x50xf32>
    %35 = arith.mulf %30, %34 : vector<8x50xf32>
    %cst_17 = arith.constant dense<0.000000e+00> : vector<8xf32>
    %36 = vector.multi_reduction <add>, %35, %cst_17 [1] : vector<8x50xf32> to vector<8xf32>
    %37 = vector.shape_cast %36 : vector<8xf32> to vector<8x1xf32>
    %c0_i32 = arith.constant 0 : i32
    %38 = vector.broadcast %c0_i32 : i32 to vector<8x2xi32>
    %39 = arith.cmpi eq, %31, %38 : vector<8x2xi32>
    %cst_18 = arith.constant 0.000000e+00 : f32
    %40 = vector.shape_cast %37 : vector<8x1xf32> to vector<8x1xf32>
    %41 = vector.broadcast %40 : vector<8x1xf32> to vector<8x2xf32>
    %42 = vector.broadcast %cst_18 : f32 to vector<8x2xf32>
    %43 = arith.select %39, %41, %42 : vector<8x2xi1>, vector<8x2xf32>
    %44 = arith.addf %32, %43 : vector<8x2xf32>
    %c3 = arith.constant 3 : index
    %c0_19 = arith.constant 0 : index
    %45 = vector.load %arg3[%c3, %c0_19] : memref<8x128xf32, #tpu.memory_space<vmem>>, vector<1x50xf32>
    %46 = vector.broadcast %45 : vector<1x50xf32> to vector<8x50xf32>
    %47 = arith.mulf %30, %46 : vector<8x50xf32>
    %cst_20 = arith.constant dense<0.000000e+00> : vector<8xf32>
    %48 = vector.multi_reduction <add>, %47, %cst_20 [1] : vector<8x50xf32> to vector<8xf32>
    %49 = vector.shape_cast %48 : vector<8xf32> to vector<8x1xf32>
    %c1_i32 = arith.constant 1 : i32
    %50 = vector.broadcast %c1_i32 : i32 to vector<8x2xi32>
    %51 = arith.cmpi eq, %31, %50 : vector<8x2xi32>
    %cst_21 = arith.constant 0.000000e+00 : f32
    %52 = vector.shape_cast %49 : vector<8x1xf32> to vector<8x1xf32>
    %53 = vector.broadcast %52 : vector<8x1xf32> to vector<8x2xf32>
    %54 = vector.broadcast %cst_21 : f32 to vector<8x2xf32>
    %55 = arith.select %51, %53, %54 : vector<8x2xi1>, vector<8x2xf32>
    %56 = arith.addf %44, %55 : vector<8x2xf32>
    %c7 = arith.constant 7 : index
    %c0_22 = arith.constant 0 : index
    %57 = vector.load %arg3[%c7, %c0_22] : memref<8x128xf32, #tpu.memory_space<vmem>>, vector<1x2xf32>
    %58 = vector.broadcast %57 : vector<1x2xf32> to vector<8x2xf32>
    %59 = arith.addf %56, %58 : vector<8x2xf32>
    %c0_23 = arith.constant 0 : index
    %c0_24 = arith.constant 0 : index
    %60 = vector.load %arg4[%c0_23, %c0_24] : memref<8x2xf32, #tpu.memory_space<vmem>>, vector<8x2xf32>
    tpu.vector_store %arg4[%c0_23, %c0_24], %59 {strides = array<i32>} : memref<8x2xf32, #tpu.memory_space<vmem>>, vector<8x2xf32>,
    return
  }
}

</mosaic_0001>

<llo_original>
// kernel: _forward_impl.1
$region0: #{_forward_impl.1}
  #allocation0 [shape = 'u32[]', space=smem, size = 0x4, offset = 0x4, fixed_abs, tag = 'smem constant byte address 0x4 - core index']
  #allocation1 [shape = 'u32[72,128]{1,0:T(1,128)}', space=vmem, size = 0x9000, scoped, tag = 'internal scratch']
  %s0 = inlined_call_operand.vmem [shape: f32[8,2], index: 0, kind: input, shape index: {}]
  %s1 = inlined_call_operand.vmem [shape: f32[50,100], index: 1, kind: input, shape index: {}]
  %s2 = inlined_call_operand.vmem [shape: f32[100,50], index: 2, kind: input, shape index: {}]
  %s3 = inlined_call_operand.vmem [shape: f32[8,128], index: 3, kind: input, shape index: {}]
  %s4 = inlined_call_operand.vmem [shape: f32[8,2], index: 4, kind: output, shape index: {}]
  %s5 = sld [smem:[#allocation0]]
  $region26: #{_forward_impl.1} parent=0
    _
  %s7 = ssub.s32 1, %s5
  %s8 = scalar_select 0, %s7, %s5
  // Predicated region
  $region2: #{_forward_impl.1} parent=0 // pred_check
    _
  $region3: #{_forward_impl.1} parent=0 // pred_check_branch
    %10 = sbr.rel (0) target = $region5
  $region4: #{_forward_impl.1} parent=0 // pred_region
    _
  $region5: #{_forward_impl.1} parent=0 // pred_fallthru
    _
  // Predicated region
  $region6: #{_forward_impl.1} parent=0 // pred_check
    _
  $region7: #{_forward_impl.1} parent=0 // pred_check_branch
    %12 = sbr.rel (0) target = $region9
  $region8: #{_forward_impl.1} parent=0 // pred_region
    _
  $region9: #{_forward_impl.1} parent=0 // pred_fallthru
    _
  // Predicated region
  $region10: #{_forward_impl.1} parent=0 // pred_check
    _
  $region11: #{_forward_impl.1} parent=0 // pred_check_branch
    %14 = sbr.rel (0) target = $region13
  $region12: #{_forward_impl.1} parent=0 // pred_region
    _
  $region13: #{_forward_impl.1} parent=0 // pred_fallthru
    _
  // Predicated region
  $region14: #{_forward_impl.1} parent=0 // pred_check
    _
  $region15: #{_forward_impl.1} parent=0 // pred_check_branch
    %16 = sbr.rel (0) target = $region17
  $region16: #{_forward_impl.1} parent=0 // pred_region
    _
  $region17: #{_forward_impl.1} parent=0 // pred_fallthru
    _
  %v17 = vld [vmem:[%s0] sm:$0xff]
  %v18 = vld [vmem:[%s3] sm:$0x1]
  %20 = vset.pattern.permute.xlu0 0
  %21 = vperm.xlu0 %20, %v17
  %v22 = vpop.permute.xlu0 %21
  %v24 = vperm.slane %v18, 0
  %v25 = vmul.f32 %v22, %v24
  %v26 = vld [vmem:[%s3 + $0x1] sm:$0x1]
  %27 = vset.pattern.permute.xlu0 1
  %28 = vperm.xlu0 %27, %v17
  %v29 = vpop.permute.xlu0 %28
  %v31 = vperm.slane %v26, 0
  %v32 = vmul.f32 %v29, %v31
  %v33 = vadd.f32 %v25, %v32
  %v34 = vld [vmem:[%s3 + $0x4] sm:$0x1]
  %v35 = vperm.slane %v34, 0
  %v36 = vadd.f32 %v33, %v35
  %v37 = vmax.f32 %v36, 0.0
  %v38 = vld [vmem:[%s1] sm:$0xff]
  %v39 = vld [vmem:[%s1 + $0x8] sm:$0xff]
  %v40 = vld [vmem:[%s1 + $0x10] sm:$0xff]
  %v41 = vld [vmem:[%s1 + $0x18] sm:$0xff]
  %v42 = vld [vmem:[%s1 + $0x20] sm:$0xff]
  %v43 = vld [vmem:[%s1 + $0x28] sm:$0xff]
  %v44 = vld [vmem:[%s1 + $0x30] sm:$0x3]
  %v45 = vld [vmem:[%s3 + $0x5] sm:$0x1]
  %v46 = vperm.slane %v45, 0
  %vm47 = vcmask 408576
  %v49 = vsel %vm47, %v37, 0
  %vm51 = vcmask 1041408
  %v53 = vsel %vm51, %v44, 0
  %55 = vmatpush.msra.mxu0 0.0
  %56 = vmatpush.msra.mxu0 0.0
  %57 = vmatpush.msra.mxu0 0.0
  %58 = vmatpush.msra.mxu0 0.0
  %59 = vmatpush.msra.mxu0 0.0
  %60 = vmatpush.msra.mxu0 0.0
  %61 = vmatpush.msra.mxu0 0.0
  %62 = vmatpush.msra.mxu0 0.0
  %63 = vmatpush.msra.mxu0 0.0
  %64 = vmatpush.msra.mxu0 %v53
  %65 = vmatpush.msra.mxu0 %v43
  %66 = vmatpush.msra.mxu0 %v42
  %67 = vmatpush.msra.mxu0 %v41
  %68 = vmatpush.msra.mxu0 %v40
  %69 = vmatpush.msra.mxu0 %v39
  %70 = vmatpush.msra.mxu0 %v38
  %71 = vmatmul.f32.gmra.mxu0 %v49
  %v72 = vpop.f32.mrf.mxu0
  %v73 = vadd.f32 %v46, %v72
  %74 = vdwg.mxu0
  %v75 = vmax.f32 %v73, 0.0
  %v76 = vld [vmem:[%s2] sm:$0xff]
  %v77 = vld [vmem:[%s2 + $0x8] sm:$0xff]
  %v78 = vld [vmem:[%s2 + $0x10] sm:$0xff]
  %v79 = vld [vmem:[%s2 + $0x18] sm:$0xff]
  %v80 = vld [vmem:[%s2 + $0x20] sm:$0xff]
  %v81 = vld [vmem:[%s2 + $0x28] sm:$0xff]
  %v82 = vld [vmem:[%s2 + $0x30] sm:$0xff]
  %v83 = vld [vmem:[%s2 + $0x38] sm:$0xff]
  %v84 = vld [vmem:[%s2 + $0x40] sm:$0xff]
  %v85 = vld [vmem:[%s2 + $0x48] sm:$0xff]
  %v86 = vld [vmem:[%s2 + $0x50] sm:$0xff]
  %v87 = vld [vmem:[%s2 + $0x58] sm:$0xff]
  %v88 = vld [vmem:[%s2 + $0x60] sm:$0xf]
  %v89 = vld [vmem:[%s3 + $0x6] sm:$0x1]
  %v90 = vperm.slane %v89, 0
  %vm91 = vcmask 818176
  %v93 = vsel %vm91, %v75, 0
  %vm95 = vcmask 1043456
  %v97 = vsel %vm95, %v88, 0
  %99 = vmatpush.msra.mxu0 0.0
  %100 = vmatpush.msra.mxu0 0.0
  %101 = vmatpush.msra.mxu0 0.0
  %102 = vmatpush.msra.mxu0 %v97
  %103 = vmatpush.msra.mxu0 %v87
  %104 = vmatpush.msra.mxu0 %v86
  %105 = vmatpush.msra.mxu0 %v85
  %106 = vmatpush.msra.mxu0 %v84
  %107 = vmatpush.msra.mxu0 %v83
  %108 = vmatpush.msra.mxu0 %v82
  %109 = vmatpush.msra.mxu0 %v81
  %110 = vmatpush.msra.mxu0 %v80
  %111 = vmatpush.msra.mxu0 %v79
  %112 = vmatpush.msra.mxu0 %v78
  %113 = vmatpush.msra.mxu0 %v77
  %114 = vmatpush.msra.mxu0 %v76
  %115 = vmatmul.f32.gmra.mxu0 %v93
  %v116 = vpop.f32.mrf.mxu0
  %v117 = vadd.f32 %v90, %v116
  %118 = vdwg.mxu0
  %v119 = vmax.f32 %v117, 0.0
  %v120 = vlaneseq
  %v121 = vand.u32 %v120, 127
  %v122 = vld [vmem:[%s3 + $0x2] sm:$0x1]
  %v123 = vperm.slane %v122, 0
  %v124 = vmul.f32 %v119, %v123
  %v125 = vsel %vm47, %v124, 0.0
  %126 = vadd.xlane.f32.xlu0 %v125
  %v127 = vpop.xlane.xlu0 %126
  %vm128 = vcmp.eq.s32.totalorder %v121, 0
  %v129 = vsel %vm128, %v127, 0.0
  %v130 = vadd.f32 %v129, 0.0
  %v131 = vld [vmem:[%s3 + $0x3] sm:$0x1]
  %v132 = vperm.slane %v131, 0
  %v133 = vmul.f32 %v119, %v132
  %v134 = vsel %vm47, %v133, 0.0
  %135 = vadd.xlane.f32.xlu0 %v134
  %v136 = vpop.xlane.xlu0 %135
  %vm137 = vcmp.eq.s32.totalorder %v121, 1
  %v138 = vsel %vm137, %v136, 0.0
  %v139 = vadd.f32 %v130, %v138
  %v140 = vld [vmem:[%s3 + $0x7] sm:$0x1]
  %v141 = vperm.slane %v140, 0
  %v142 = vadd.f32 %v139, %v141
  %vm143 = vcmask 15360
  %144 = vst.msk [vmem:[%s4] sm:$0xff] %vm143, %v142
  // Predicated region
  $region18: #{_forward_impl.1} parent=0 // pred_check
    _
  $region19: #{_forward_impl.1} parent=0 // pred_check_branch
    %146 = sbr.rel (0) target = $region21
  $region20: #{_forward_impl.1} parent=0 // pred_region
    _
  $region21: #{_forward_impl.1} parent=0 // pred_fallthru
    _
  // Predicated region
  $region22: #{_forward_impl.1} parent=0 // pred_check
    _
  $region23: #{_forward_impl.1} parent=0 // pred_check_branch
    %148 = sbr.rel (0) target = $region25
  $region24: #{_forward_impl.1} parent=0 // pred_region
    _
  $region25: #{_forward_impl.1} parent=0 // pred_fallthru
    _

</llo_original>
